<compile_context>
chip_gen: v7x
topology: tpu7x:2x2x1
jax: 0.10.0
libtpu: 0.0.40
codegen_flags: <defaults>
</compile_context>

<pallas_src>
import math
import functools

import jax
import jax.numpy as jnp
from jax import lax
from jax.experimental import pallas as pl
from jax.experimental.pallas import tpu as pltpu

_GELU_K = math.sqrt(2.0 / math.pi)
_HIGH = jax.lax.Precision.HIGHEST  # only used by the pure-JAX reference


def decoder_block_kernel(x_ref, w_aug_ref, w_proj_ref, w_fc1_ref, w_fc2_ref,
                         vec_ref, tab_ref, out_ref, *, n_head, head_dim, eps):
  x = x_ref[...].astype(jnp.float32)                       # (R, C), R = B*T
  R, C = x.shape
  HR = n_head * R

  # ---- packed small constants (each row starts at lane 0 -> no lane shifts) ----
  ln1    = vec_ref[0:1, 0:C]
  b_aug  = vec_ref[1:2, 0:5 * C]
  b_proj = vec_ref[2:3, 0:C]
  b_fc1  = vec_ref[3:4, 0:4 * C]
  b_fc2  = vec_ref[4:5, 0:C]
  ln2    = vec_ref[5:6, 0:C]

  cos  = tab_ref[0:R, 0:C]                                 # (R, C)
  sin  = tab_ref[R:2 * R, 0:C]                             # (R, C), sign-interleaved
  mask = tab_ref[2 * R:2 * R + HR, 0:HR]                   # (HR, HR) additive mask

  # ---------------- RMSNorm 1 ----------------
  inv1 = lax.rsqrt(jnp.sum(x * x, axis=-1, keepdims=True) * (1.0 / C) + eps)
  h1 = x * inv1 * ln1

  # ---- fused QKV (+ pre-swapped Q/K for RoPE; score scale folded in) ----
  qkv = jnp.dot(h1, w_aug_ref[...],
                preferred_element_type=jnp.float32) + b_aug          # (R, 5C)
  q, k, v = qkv[:, 0:C], qkv[:, C:2 * C], qkv[:, 2 * C:3 * C]
  qs, ks = qkv[:, 3 * C:4 * C], qkv[:, 4 * C:5 * C]

  # rotary embedding is now purely elementwise (swap folded into the weights)
  qr = q * cos + qs * sin
  kr = k * cos + ks * sin

  # ---- stack heads along rows: (n_head*R, head_dim) ----
  qh = jnp.concatenate(
      [qr[:, h * head_dim:(h + 1) * head_dim] for h in range(n_head)], axis=0)
  kh = jnp.concatenate(
      [kr[:, h * head_dim:(h + 1) * head_dim] for h in range(n_head)], axis=0)
  vh = jnp.concatenate(
      [v[:, h * head_dim:(h + 1) * head_dim] for h in range(n_head)], axis=0)

  # one scores matmul + one softmax + one PV matmul for all heads & batches;
  # cross-head / cross-batch blocks are killed by the additive mask.
  att = lax.dot_general(qh, kh, (((1,), (1,)), ((), ())),
                        preferred_element_type=jnp.float32) + mask   # (HR, HR)
  att = att - jnp.max(att, axis=-1, keepdims=True)
  e = jnp.exp(att)
  p = e * pl.reciprocal(jnp.sum(e, axis=-1, keepdims=True), approx=True)
  yh = jnp.dot(p, vh, preferred_element_type=jnp.float32)            # (HR, hd)

  # ---- output projection: fold per-head slabs straight into the C_out space ----
  y = jnp.dot(yh[0:R, :], w_proj_ref[0:head_dim, :],
              preferred_element_type=jnp.float32)
  for h in range(1, n_head):
    y = y + jnp.dot(yh[h * R:(h + 1) * R, :],
                    w_proj_ref[h * head_dim:(h + 1) * head_dim, :],
                    preferred_element_type=jnp.float32)
  y = y + b_proj                                                     # (R, C)

  # ---------------- RMSNorm 2 ----------------
  inv2 = lax.rsqrt(jnp.sum(y * y, axis=-1, keepdims=True) * (1.0 / C) + eps)
  h2 = y * inv2 * ln2

  # ---------------- MLP with BERT-GELU ----------------
  m = jnp.dot(h2, w_fc1_ref[...], preferred_element_type=jnp.float32) + b_fc1
  m = 0.5 * m * (1.0 + jnp.tanh(_GELU_K * (m + 0.044715 * (m * m * m))))
  m = jnp.dot(m, w_fc2_ref[...], preferred_element_type=jnp.float32) + b_fc2

  # ---------------- residual (dropouts are identity in eval) ----------------
  out_ref[...] = (x + m).astype(out_ref.dtype)


def transformer_decoder_block(x, params, *, n_head):
  B, T, C = x.shape
  hd = C // n_head
  R = B * T
  HR = n_head * R
  scale = 1.0 / math.sqrt(hd)
  f32 = jnp.float32

  # ---- wrapper-side weight plumbing (glue, deterministic) ----
  w_attn = params['w_attn'].astype(f32)        # (C, 3C), PyTorch head-interleaved cols
  b_attn = params['b_attn'].astype(f32)

  # PyTorch qkv layout: col = h*3*hd + part*hd + d   ->   head-major [Q | K | V]
  h_idx = jnp.arange(n_head)
  d_idx = jnp.arange(hd)

  def part_cols(part):
    return (h_idx[:, None] * 3 * hd + part * hd + d_idx[None, :]).reshape(-1)

  qc, kc, vc = part_cols(0), part_cols(1), part_cols(2)
  swap = jnp.arange(C) ^ 1                     # interleaved pair swap (per head)

  w_q, w_k, w_v = w_attn[:, qc], w_attn[:, kc], w_attn[:, vc]
  b_q, b_k, b_v = b_attn[qc], b_attn[kc], b_attn[vc]
  w_qs, b_qs = w_q[:, swap], b_q[swap]         # (x@Wq + bq) @ P  ==  x@(Wq P) + bq P
  w_ks, b_ks = w_k[:, swap], b_k[swap]

  # fold 1/sqrt(head_dim) into the Q pathway so no in-kernel scale is needed
  w_aug = jnp.concatenate(
      [w_q * scale, w_k, w_v, w_qs * scale, w_ks], axis=1)           # (C, 5C)
  b_aug = jnp.concatenate(
      [b_q * scale, b_k, b_v, b_qs * scale, b_ks])                   # (5C,)

  # ---- RoPE tables tiled over heads and batch -> (R, C) ----
  inv_freq = 1.0 / (10000.0 ** (jnp.arange(0, hd, 2, dtype=f32) / hd))
  t = jnp.arange(T, dtype=f32)
  theta = t[:, None] * inv_freq[None, :]                             # (T, hd//2)
  cos_h = jnp.repeat(jnp.cos(theta), 2, axis=-1)                     # c0,c0,c1,c1,...
  sin_h = jnp.stack([jnp.sin(theta), -jnp.sin(theta)], -1).reshape(T, hd)
  cos_bt = jnp.tile(cos_h, (B, n_head))                              # (R, C)
  sin_bt = jnp.tile(sin_h, (B, n_head))

  # ---- combined head-block / batch-block / "anti-causal" additive mask ----
  ridx = jnp.arange(HR)
  rh = ridx // R                   # head id
  rb = (ridx % R) // T             # batch id
  rt = (ridx % R) % T              # position
  allowed = ((rh[:, None] == rh[None, :]) &
             (rb[:, None] == rb[None, :]) &
             (rt[None, :] >= rt[:, None]))    # mask j < i, as in the reference
  mask = jnp.where(allowed, 0.0, -1e30).astype(f32)                  # (HR, HR)

  # ---- pack the small constants into two arrays (fewer DMA streams) ----
  vec = jnp.zeros((8, 5 * C), f32)
  vec = vec.at[0, 0:C].set(params['ln1'].astype(f32))
  vec = vec.at[1, 0:5 * C].set(b_aug)
  vec = vec.at[2, 0:C].set(params['b_proj'].astype(f32))
  vec = vec.at[3, 0:4 * C].set(params['b_fc1'].astype(f32))
  vec = vec.at[4, 0:C].set(params['b_fc2'].astype(f32))
  vec = vec.at[5, 0:C].set(params['ln2'].astype(f32))

  tabw = max(C, HR)
  tab = jnp.zeros((2 * R + HR, tabw), f32)
  tab = tab.at[0:R, 0:C].set(cos_bt)
  tab = tab.at[R:2 * R, 0:C].set(sin_bt)
  tab = tab.at[2 * R:, 0:HR].set(mask)

  x2d = x.reshape(R, C).astype(f32)

  kernel = functools.partial(decoder_block_kernel, n_head=n_head,
                             head_dim=hd, eps=1e-6)
  vmem = pltpu.MemorySpace.VMEM
  out2d = pl.pallas_call(
      kernel,
      out_shape=jax.ShapeDtypeStruct((R, C), x.dtype),
      in_specs=[pl.BlockSpec(memory_space=vmem)] * 7,
      out_specs=pl.BlockSpec(memory_space=vmem),
  )(x2d, w_aug, params['w_proj'].astype(f32), params['w_fc1'].astype(f32),
    params['w_fc2'].astype(f32), vec, tab)
  return out2d.reshape(B, T, C)


# ---------------- pure-JAX reference (for verification) ----------------
def reference_block(x, params, *, n_head):
  B, T, C = x.shape
  hd = C // n_head

  def rmsnorm(v, w):
    return v / jnp.sqrt(jnp.sum(v * v, -1, keepdims=True) / C + 1e-6) * w

  h = rmsnorm(x, params['ln1'])
  qkv = h @ params['w_attn'] + params['b_attn']            # (B, T, 3C)
  qkv = qkv.reshape(B, T, n_head, 3 * hd).transpose(0, 2, 1, 3)
  q, k, v = qkv[..., :hd], qkv[..., hd:2 * hd], qkv[..., 2 * hd:]

  inv_freq = 1.0 / (10000.0 ** (jnp.arange(0, hd, 2, dtype=jnp.float32) / hd))
  t = jnp.arange(T, dtype=jnp.float32)
  theta = t[:, None] * inv_freq[None, :]
  cos, sin = jnp.cos(theta), jnp.sin(theta)

  def rope(z):
    ze, zo = z[..., 0::2], z[..., 1::2]
    re = cos * ze + sin * zo
    ro = -sin * ze + cos * zo
    return jnp.stack([re, ro], -1).reshape(z.shape)

  q, k = rope(q), rope(k)
  att = jnp.einsum('bhqd,bhkd->bhqk', q, k, precision=_HIGH) / math.sqrt(hd)
  row = jnp.arange(T)[:, None]
  col = jnp.arange(T)[None, :]
  att = att + jnp.where(col < row, -jnp.inf, 0.0)          # same (anti-causal) mask
  att = jax.nn.softmax(att, axis=-1)
  y = jnp.einsum('bhqk,bhkd->bhqd', att, v, precision=_HIGH)
  y = y.transpose(0, 2, 1, 3).reshape(B, T, C)
  y = y @ params['w_proj'] + params['b_proj']
  h2 = rmsnorm(y, params['ln2'])
  m = h2 @ params['w_fc1'] + params['b_fc1']
  m = 0.5 * m * (1.0 + jnp.tanh(_GELU_K * (m + 0.044715 * m ** 3)))
  m = m @ params['w_fc2'] + params['b_fc2']
  return x + m


if __name__ == "__main__":
  B, T, C, NH = 2, 8, 32, 4
  key = jax.random.PRNGKey(0)
  ks = jax.random.split(key, 12)
  sc = 1.0 / math.sqrt(C)
  f32 = jnp.float32
  params = dict(
      ln1=1.0 + 0.1 * jax.random.normal(ks[0], (C,), f32),
      w_attn=sc * jax.random.normal(ks[1], (C, 3 * C), f32),
      b_attn=0.02 * jax.random.normal(ks[2], (3 * C,), f32),
      w_proj=sc * jax.random.normal(ks[3], (C, C), f32),
      b_proj=0.02 * jax.random.normal(ks[4], (C,), f32),
      ln2=1.0 + 0.1 * jax.random.normal(ks[5], (C,), f32),
      w_fc1=sc * jax.random.normal(ks[6], (C, 4 * C), f32),
      b_fc1=0.02 * jax.random.normal(ks[7], (4 * C,), f32),
      w_fc2=(1.0 / math.sqrt(4 * C)) * jax.random.normal(ks[8], (4 * C, C), f32),
      b_fc2=0.02 * jax.random.normal(ks[9], (C,), f32),
  )
  x = jax.random.normal(ks[10], (B, T, C), f32)

  out = jax.block_until_ready(transformer_decoder_block(x, params, n_head=NH))
  ref = jax.block_until_ready(reference_block(x, params, n_head=NH))

  assert out.shape == (B, T, C) and out.dtype == jnp.float32
  max_err = float(jnp.max(jnp.abs(out - ref)))
  # kernel uses default MXU precision (per perf review); reference is HIGHEST f32
  assert bool(jnp.allclose(out, ref, atol=3e-2, rtol=3e-2)), (
      f"mismatch vs reference (max abs err {max_err})")

  # TODO(synk): dropout layers (attn/resid/mlp) are identity at inference and
  # are not implemented as stochastic ops inside the kernel.
  print("KERNEL_OK")
</pallas_src>

<mosaic_0001>
module attributes {stable_mosaic.version = 11 : i64} {
  func.func @decoder_block_kernel(%arg0: memref<16x32xf32, #tpu.memory_space<vmem>>, %arg1: memref<32x160xf32, #tpu.memory_space<vmem>>, %arg2: memref<32x32xf32, #tpu.memory_space<vmem>>, %arg3: memref<32x128xf32, #tpu.memory_space<vmem>>, %arg4: memref<128x32xf32, #tpu.memory_space<vmem>>, %arg5: memref<8x160xf32, #tpu.memory_space<vmem>>, %arg6: memref<96x64xf32, #tpu.memory_space<vmem>>, %arg7: memref<16x32xf32, #tpu.memory_space<vmem>>) attributes {dimension_semantics = [], scalar_prefetch = 0 : i64, scratch_operands = 0 : i64, tpu.core_type = #tpu.core_type<tc>} {
    %c0 = arith.constant 0 : index
    %c0_0 = arith.constant 0 : index
    %0 = vector.load %arg0[%c0, %c0_0] : memref<16x32xf32, #tpu.memory_space<vmem>>, vector<16x32xf32>
    %c0_1 = arith.constant 0 : index
    %c0_2 = arith.constant 0 : index
    %1 = vector.load %arg5[%c0_1, %c0_2] : memref<8x160xf32, #tpu.memory_space<vmem>>, vector<1x32xf32>
    %c1 = arith.constant 1 : index
    %c0_3 = arith.constant 0 : index
    %2 = vector.load %arg5[%c1, %c0_3] : memref<8x160xf32, #tpu.memory_space<vmem>>, vector<1x160xf32>
    %c2 = arith.constant 2 : index
    %c0_4 = arith.constant 0 : index
    %3 = vector.load %arg5[%c2, %c0_4] : memref<8x160xf32, #tpu.memory_space<vmem>>, vector<1x32xf32>
    %c3 = arith.constant 3 : index
    %c0_5 = arith.constant 0 : index
    %4 = vector.load %arg5[%c3, %c0_5] : memref<8x160xf32, #tpu.memory_space<vmem>>, vector<1x128xf32>
    %c4 = arith.constant 4 : index
    %c0_6 = arith.constant 0 : index
    %5 = vector.load %arg5[%c4, %c0_6] : memref<8x160xf32, #tpu.memory_space<vmem>>, vector<1x32xf32>
    %c5 = arith.constant 5 : index
    %c0_7 = arith.constant 0 : index
    %6 = vector.load %arg5[%c5, %c0_7] : memref<8x160xf32, #tpu.memory_space<vmem>>, vector<1x32xf32>
    %c0_8 = arith.constant 0 : index
    %c0_9 = arith.constant 0 : index
    %7 = vector.load %arg6[%c0_8, %c0_9] : memref<96x64xf32, #tpu.memory_space<vmem>>, vector<16x32xf32>
    %c16 = arith.constant 16 : index
    %c0_10 = arith.constant 0 : index
    %8 = vector.load %arg6[%c16, %c0_10] : memref<96x64xf32, #tpu.memory_space<vmem>>, vector<16x32xf32>
    %c32 = arith.constant 32 : index
    %c0_11 = arith.constant 0 : index
    %9 = vector.load %arg6[%c32, %c0_11] : memref<96x64xf32, #tpu.memory_space<vmem>>, vector<64x64xf32>
    %10 = arith.mulf %0, %0 : vector<16x32xf32>
    %cst = arith.constant dense<0.000000e+00> : vector<16xf32>
    %11 = vector.multi_reduction <add>, %10, %cst [1] : vector<16x32xf32> to vector<16xf32>
    %12 = vector.shape_cast %11 : vector<16xf32> to vector<16x1xf32>
    %cst_12 = arith.constant 3.125000e-02 : f32
    %13 = vector.broadcast %cst_12 : f32 to vector<16x1xf32>
    %14 = arith.mulf %12, %13 : vector<16x1xf32>
    %cst_13 = arith.constant 9.99999997E-7 : f32
    %15 = vector.broadcast %cst_13 : f32 to vector<16x1xf32>
    %16 = arith.addf %14, %15 : vector<16x1xf32>
    %17 = math.rsqrt %16 : vector<16x1xf32>
    %18 = vector.broadcast %17 : vector<16x1xf32> to vector<16x32xf32>
    %19 = arith.mulf %0, %18 : vector<16x32xf32>
    %20 = vector.broadcast %1 : vector<1x32xf32> to vector<16x32xf32>
    %21 = arith.mulf %19, %20 : vector<16x32xf32>
    %c0_14 = arith.constant 0 : index
    %c0_15 = arith.constant 0 : index
    %22 = vector.load %arg1[%c0_14, %c0_15] : memref<32x160xf32, #tpu.memory_space<vmem>>, vector<32x160xf32>
    %cst_16 = arith.constant dense<0.000000e+00> : vector<16x160xf32>
    %23 = tpu.matmul %21, %22, %cst_16 {dimension_numbers = #tpu.dot_dimension_numbers<[1], [0], [0], [1], [0, 0, 1, 1], [], []>} : vector<16x32xf32>, vector<32x160xf32>, vector<16x160xf32> -> vector<16x160xf32>
    %24 = vector.broadcast %2 : vector<1x160xf32> to vector<16x160xf32>
    %25 = arith.addf %23, %24 : vector<16x160xf32>
    %26 = vector.extract_strided_slice %25 {offsets = [0, 0], sizes = [16, 32], strides = [1, 1]} : vector<16x160xf32> to vector<16x32xf32>
    %27 = vector.extract_strided_slice %25 {offsets = [0, 32], sizes = [16, 32], strides = [1, 1]} : vector<16x160xf32> to vector<16x32xf32>
    %28 = vector.extract_strided_slice %25 {offsets = [0, 64], sizes = [16, 32], strides = [1, 1]} : vector<16x160xf32> to vector<16x32xf32>
    %29 = vector.extract_strided_slice %25 {offsets = [0, 96], sizes = [16, 32], strides = [1, 1]} : vector<16x160xf32> to vector<16x32xf32>
    %30 = vector.extract_strided_slice %25 {offsets = [0, 128], sizes = [16, 32], strides = [1, 1]} : vector<16x160xf32> to vector<16x32xf32>
    %31 = arith.mulf %26, %7 : vector<16x32xf32>
    %32 = arith.mulf %29, %8 : vector<16x32xf32>
    %33 = arith.addf %31, %32 : vector<16x32xf32>
    %34 = arith.mulf %27, %7 : vector<16x32xf32>
    %35 = arith.mulf %30, %8 : vector<16x32xf32>
    %36 = arith.addf %34, %35 : vector<16x32xf32>
    %37 = vector.extract_strided_slice %33 {offsets = [0, 0], sizes = [16, 8], strides = [1, 1]} : vector<16x32xf32> to vector<16x8xf32>
    %38 = vector.extract_strided_slice %33 {offsets = [0, 8], sizes = [16, 8], strides = [1, 1]} : vector<16x32xf32> to vector<16x8xf32>
    %39 = vector.extract_strided_slice %33 {offsets = [0, 16], sizes = [16, 8], strides = [1, 1]} : vector<16x32xf32> to vector<16x8xf32>
    %40 = vector.extract_strided_slice %33 {offsets = [0, 24], sizes = [16, 8], strides = [1, 1]} : vector<16x32xf32> to vector<16x8xf32>
    %41 = tpu.concatenate %37, %38, %39, %40 in 0 : vector<16x8xf32>, vector<16x8xf32>, vector<16x8xf32>, vector<16x8xf32> -> vector<64x8xf32>
    %42 = vector.extract_strided_slice %36 {offsets = [0, 0], sizes = [16, 8], strides = [1, 1]} : vector<16x32xf32> to vector<16x8xf32>
    %43 = vector.extract_strided_slice %36 {offsets = [0, 8], sizes = [16, 8], strides = [1, 1]} : vector<16x32xf32> to vector<16x8xf32>
    %44 = vector.extract_strided_slice %36 {offsets = [0, 16], sizes = [16, 8], strides = [1, 1]} : vector<16x32xf32> to vector<16x8xf32>
    %45 = vector.extract_strided_slice %36 {offsets = [0, 24], sizes = [16, 8], strides = [1, 1]} : vector<16x32xf32> to vector<16x8xf32>
    %46 = tpu.concatenate %42, %43, %44, %45 in 0 : vector<16x8xf32>, vector<16x8xf32>, vector<16x8xf32>, vector<16x8xf32> -> vector<64x8xf32>
    %47 = vector.extract_strided_slice %28 {offsets = [0, 0], sizes = [16, 8], strides = [1, 1]} : vector<16x32xf32> to vector<16x8xf32>
    %48 = vector.extract_strided_slice %28 {offsets = [0, 8], sizes = [16, 8], strides = [1, 1]} : vector<16x32xf32> to vector<16x8xf32>
    %49 = vector.extract_strided_slice %28 {offsets = [0, 16], sizes = [16, 8], strides = [1, 1]} : vector<16x32xf32> to vector<16x8xf32>
    %50 = vector.extract_strided_slice %28 {offsets = [0, 24], sizes = [16, 8], strides = [1, 1]} : vector<16x32xf32> to vector<16x8xf32>
    %51 = tpu.concatenate %47, %48, %49, %50 in 0 : vector<16x8xf32>, vector<16x8xf32>, vector<16x8xf32>, vector<16x8xf32> -> vector<64x8xf32>
    %cst_17 = arith.constant dense<0.000000e+00> : vector<64x64xf32>
    %52 = tpu.matmul %41, %46, %cst_17 {dimension_numbers = #tpu.dot_dimension_numbers<[1], [1], [0], [0], [0, 0, 1, 0], [], []>} : vector<64x8xf32>, vector<64x8xf32>, vector<64x64xf32> -> vector<64x64xf32>
    %53 = arith.addf %52, %9 : vector<64x64xf32>
    %cst_18 = arith.constant dense<0xFF800000> : vector<64xf32>
    %54 = vector.multi_reduction <maximumf>, %53, %cst_18 [1] : vector<64x64xf32> to vector<64xf32>
    %55 = vector.shape_cast %54 : vector<64xf32> to vector<64x1xf32>
    %56 = vector.broadcast %55 : vector<64x1xf32> to vector<64x64xf32>
    %57 = arith.subf %53, %56 : vector<64x64xf32>
    %58 = math.exp %57 : vector<64x64xf32>
    %cst_19 = arith.constant dense<0.000000e+00> : vector<64xf32>
    %59 = vector.multi_reduction <add>, %58, %cst_19 [1] : vector<64x64xf32> to vector<64xf32>
    %60 = vector.shape_cast %59 : vector<64xf32> to vector<64x1xf32>
    %61 = tpu.reciprocal %60 {approx = true} : vector<64x1xf32> -> vector<64x1xf32>
    %62 = vector.broadcast %61 : vector<64x1xf32> to vector<64x64xf32>
    %63 = arith.mulf %58, %62 : vector<64x64xf32>
    %cst_20 = arith.constant dense<0.000000e+00> : vector<64x8xf32>
    %64 = tpu.matmul %63, %51, %cst_20 {dimension_numbers = #tpu.dot_dimension_numbers<[1], [0], [0], [1], [0, 0, 1, 1], [], []>} : vector<64x64xf32>, vector<64x8xf32>, vector<64x8xf32> -> vector<64x8xf32>
    %65 = vector.extract_strided_slice %64 {offsets = [0, 0], sizes = [16, 8], strides = [1, 1]} : vector<64x8xf32> to vector<16x8xf32>
    %c0_21 = arith.constant 0 : index
    %c0_22 = arith.constant 0 : index
    %66 = vector.load %arg2[%c0_21, %c0_22] : memref<32x32xf32, #tpu.memory_space<vmem>>, vector<8x32xf32>
    %cst_23 = arith.constant dense<0.000000e+00> : vector<16x32xf32>
    %67 = tpu.matmul %65, %66, %cst_23 {dimension_numbers = #tpu.dot_dimension_numbers<[1], [0], [0], [1], [0, 0, 1, 1], [], []>} : vector<16x8xf32>, vector<8x32xf32>, vector<16x32xf32> -> vector<16x32xf32>
    %68 = vector.extract_strided_slice %64 {offsets = [16, 0], sizes = [16, 8], strides = [1, 1]} : vector<64x8xf32> to vector<16x8xf32>
    %c8 = arith.constant 8 : index
    %c0_24 = arith.constant 0 : index
    %69 = vector.load %arg2[%c8, %c0_24] : memref<32x32xf32, #tpu.memory_space<vmem>>, vector<8x32xf32>
    %cst_25 = arith.constant dense<0.000000e+00> : vector<16x32xf32>
    %70 = tpu.matmul %68, %69, %cst_25 {dimension_numbers = #tpu.dot_dimension_numbers<[1], [0], [0], [1], [0, 0, 1, 1], [], []>} : vector<16x8xf32>, vector<8x32xf32>, vector<16x32xf32> -> vector<16x32xf32>
    %71 = arith.addf %67, %70 : vector<16x32xf32>
    %72 = vector.extract_strided_slice %64 {offsets = [32, 0], sizes = [16, 8], strides = [1, 1]} : vector<64x8xf32> to vector<16x8xf32>
    %c16_26 = arith.constant 16 : index
    %c0_27 = arith.constant 0 : index
    %73 = vector.load %arg2[%c16_26, %c0_27] : memref<32x32xf32, #tpu.memory_space<vmem>>, vector<8x32xf32>
    %cst_28 = arith.constant dense<0.000000e+00> : vector<16x32xf32>
    %74 = tpu.matmul %72, %73, %cst_28 {dimension_numbers = #tpu.dot_dimension_numbers<[1], [0], [0], [1], [0, 0, 1, 1], [], []>} : vector<16x8xf32>, vector<8x32xf32>, vector<16x32xf32> -> vector<16x32xf32>
    %75 = arith.addf %71, %74 : vector<16x32xf32>
    %76 = vector.extract_strided_slice %64 {offsets = [48, 0], sizes = [16, 8], strides = [1, 1]} : vector<64x8xf32> to vector<16x8xf32>
    %c24 = arith.constant 24 : index
    %c0_29 = arith.constant 0 : index
    %77 = vector.load %arg2[%c24, %c0_29] : memref<32x32xf32, #tpu.memory_space<vmem>>, vector<8x32xf32>
    %cst_30 = arith.constant dense<0.000000e+00> : vector<16x32xf32>
    %78 = tpu.matmul %76, %77, %cst_30 {dimension_numbers = #tpu.dot_dimension_numbers<[1], [0], [0], [1], [0, 0, 1, 1], [], []>} : vector<16x8xf32>, vector<8x32xf32>, vector<16x32xf32> -> vector<16x32xf32>
    %79 = arith.addf %75, %78 : vector<16x32xf32>
    %80 = vector.broadcast %3 : vector<1x32xf32> to vector<16x32xf32>
    %81 = arith.addf %79, %80 : vector<16x32xf32>
    %82 = arith.mulf %81, %81 : vector<16x32xf32>
    %cst_31 = arith.constant dense<0.000000e+00> : vector<16xf32>
    %83 = vector.multi_reduction <add>, %82, %cst_31 [1] : vector<16x32xf32> to vector<16xf32>
    %84 = vector.shape_cast %83 : vector<16xf32> to vector<16x1xf32>
    %cst_32 = arith.constant 3.125000e-02 : f32
    %85 = vector.broadcast %cst_32 : f32 to vector<16x1xf32>
    %86 = arith.mulf %84, %85 : vector<16x1xf32>
    %cst_33 = arith.constant 9.99999997E-7 : f32
    %87 = vector.broadcast %cst_33 : f32 to vector<16x1xf32>
    %88 = arith.addf %86, %87 : vector<16x1xf32>
    %89 = math.rsqrt %88 : vector<16x1xf32>
    %90 = vector.broadcast %89 : vector<16x1xf32> to vector<16x32xf32>
    %91 = arith.mulf %81, %90 : vector<16x32xf32>
    %92 = vector.broadcast %6 : vector<1x32xf32> to vector<16x32xf32>
    %93 = arith.mulf %91, %92 : vector<16x32xf32>
    %c0_34 = arith.constant 0 : index
    %c0_35 = arith.constant 0 : index
    %94 = vector.load %arg3[%c0_34, %c0_35] : memref<32x128xf32, #tpu.memory_space<vmem>>, vector<32x128xf32>
    %cst_36 = arith.constant dense<0.000000e+00> : vector<16x128xf32>
    %95 = tpu.matmul %93, %94, %cst_36 {dimension_numbers = #tpu.dot_dimension_numbers<[1], [0], [0], [1], [0, 0, 1, 1], [], []>} : vector<16x32xf32>, vector<32x128xf32>, vector<16x128xf32> -> vector<16x128xf32>
    %96 = vector.broadcast %4 : vector<1x128xf32> to vector<16x128xf32>
    %97 = arith.addf %95, %96 : vector<16x128xf32>
    %cst_37 = arith.constant 5.000000e-01 : f32
    %98 = vector.broadcast %cst_37 : f32 to vector<16x128xf32>
    %99 = arith.mulf %98, %97 : vector<16x128xf32>
    %100 = arith.mulf %97, %97 : vector<16x128xf32>
    %101 = arith.mulf %100, %97 : vector<16x128xf32>
    %cst_38 = arith.constant 4.471500e-02 : f32
    %102 = vector.broadcast %cst_38 : f32 to vector<16x128xf32>
    %103 = arith.mulf %102, %101 : vector<16x128xf32>
    %104 = arith.addf %97, %103 : vector<16x128xf32>
    %cst_39 = arith.constant 0.797884583 : f32
    %105 = vector.broadcast %cst_39 : f32 to vector<16x128xf32>
    %106 = arith.mulf %105, %104 : vector<16x128xf32>
    %107 = math.tanh %106 : vector<16x128xf32>
    %cst_40 = arith.constant 1.000000e+00 : f32
    %108 = vector.broadcast %cst_40 : f32 to vector<16x128xf32>
    %109 = arith.addf %108, %107 : vector<16x128xf32>
    %110 = arith.mulf %99, %109 : vector<16x128xf32>
    %c0_41 = arith.constant 0 : index
    %c0_42 = arith.constant 0 : index
    %111 = vector.load %arg4[%c0_41, %c0_42] : memref<128x32xf32, #tpu.memory_space<vmem>>, vector<128x32xf32>
    %cst_43 = arith.constant dense<0.000000e+00> : vector<16x32xf32>
    %112 = tpu.matmul %110, %111, %cst_43 {dimension_numbers = #tpu.dot_dimension_numbers<[1], [0], [0], [1], [0, 0, 1, 1], [], []>} : vector<16x128xf32>, vector<128x32xf32>, vector<16x32xf32> -> vector<16x32xf32>
    %113 = vector.broadcast %5 : vector<1x32xf32> to vector<16x32xf32>
    %114 = arith.addf %112, %113 : vector<16x32xf32>
    %115 = arith.addf %0, %114 : vector<16x32xf32>
    %c0_44 = arith.constant 0 : index
    %c0_45 = arith.constant 0 : index
    %116 = vector.load %arg7[%c0_44, %c0_45] : memref<16x32xf32, #tpu.memory_space<vmem>>, vector<16x32xf32>
    tpu.vector_store %arg7[%c0_44, %c0_45], %115 {strides = array<i32>} : memref<16x32xf32, #tpu.memory_space<vmem>>, vector<16x32xf32>,
    return
  }
}

</mosaic_0001>

<llo_original>
// kernel: tpu_custom_call.1
$region0: #{tpu_custom_call.1}
  #allocation0 [shape = 'u32[]', space=smem, size = 0x4, offset = 0x4, fixed_abs, tag = 'smem constant byte address 0x4 - core index']
  #allocation1 [shape = 'u32[144,128]{1,0:T(1,128)}', space=vmem, size = 0x12000, scoped, tag = 'internal scratch']
  %s0 = inlined_call_operand.vmem [shape: f32[16,32], index: 0, kind: input, shape index: {}]
  %s1 = inlined_call_operand.vmem [shape: f32[32,160], index: 1, kind: input, shape index: {}]
  %s2 = inlined_call_operand.vmem [shape: f32[32,32], index: 2, kind: input, shape index: {}]
  %s3 = inlined_call_operand.vmem [shape: f32[32,128], index: 3, kind: input, shape index: {}]
  %s4 = inlined_call_operand.vmem [shape: f32[128,32], index: 4, kind: input, shape index: {}]
  %s5 = inlined_call_operand.vmem [shape: f32[8,160], index: 5, kind: input, shape index: {}]
  %s6 = inlined_call_operand.vmem [shape: f32[96,64], index: 6, kind: input, shape index: {}]
  %s7 = inlined_call_operand.hbm [shape: f32[16,32], index: 7, kind: output, shape index: {}]
  %s8 = sld [smem:[#allocation0]]
  $region38: #{tpu_custom_call.1} parent=0
    _
  %s10 = ssub.s32 1, %s8
  %s11 = scalar_select 0, %s10, %s8
  $region1: #{tpu_custom_call.1} parent=0
    #allocation2 [shape = 'u8[8192]{0}', space=vmem, size = 0x2000, scoped, tag = 'output window, operand 0, single buffered']
    #allocation3 [shape = 's32[1]{0}', space=sflag, size = 0x4, scoped, tag = 'scoped memory for tpu_custom_call.1']
    %12 = vsyncpa [#allocation3], 0
    // Predicated region
    $region2: #{tpu_custom_call.1} parent=1 // pred_check
      _
    $region3: #{tpu_custom_call.1} parent=1 // pred_check_branch
      %14 = sbr.rel (0) target = $region5
    $region4: #{tpu_custom_call.1} parent=1 // pred_region
      _
    $region5: #{tpu_custom_call.1} parent=1 // pred_fallthru
      _
    // Predicated region
    $region6: #{tpu_custom_call.1} parent=1 // pred_check
      _
    $region7: #{tpu_custom_call.1} parent=1 // pred_check_branch
      %16 = sbr.rel (0) target = $region9
    $region8: #{tpu_custom_call.1} parent=1 // pred_region
      _
    $region9: #{tpu_custom_call.1} parent=1 // pred_fallthru
      _
    // Predicated region
    $region10: #{tpu_custom_call.1} parent=1 // pred_check
      _
    $region11: #{tpu_custom_call.1} parent=1 // pred_check_branch
      %18 = sbr.rel (0) target = $region13
    $region12: #{tpu_custom_call.1} parent=1 // pred_region
      _
    $region13: #{tpu_custom_call.1} parent=1 // pred_fallthru
      _
    // Predicated region
    $region14: #{tpu_custom_call.1} parent=1 // pred_check
      _
    $region15: #{tpu_custom_call.1} parent=1 // pred_check_branch
      %20 = sbr.rel (0) target = $region17
    $region16: #{tpu_custom_call.1} parent=1 // pred_region
      _
    $region17: #{tpu_custom_call.1} parent=1 // pred_fallthru
      _
    // Predicated region
    $region18: #{tpu_custom_call.1} parent=1 // pred_check
      _
    $region19: #{tpu_custom_call.1} parent=1 // pred_check_branch
      %22 = sbr.rel (0) target = $region21
    $region20: #{tpu_custom_call.1} parent=1 // pred_region
      _
    $region21: #{tpu_custom_call.1} parent=1 // pred_fallthru
      _
    // Predicated region
    $region22: #{tpu_custom_call.1} parent=1 // pred_check
      _
    $region23: #{tpu_custom_call.1} parent=1 // pred_check_branch
      %24 = sbr.rel (0) target = $region25
    $region24: #{tpu_custom_call.1} parent=1 // pred_region
      _
    $region25: #{tpu_custom_call.1} parent=1 // pred_fallthru
      _
    // Predicated region
    $region26: #{tpu_custom_call.1} parent=1 // pred_check
      _
    $region27: #{tpu_custom_call.1} parent=1 // pred_check_branch
      %26 = sbr.rel (0) target = $region29
    $region28: #{tpu_custom_call.1} parent=1 // pred_region
      _
    $region29: #{tpu_custom_call.1} parent=1 // pred_fallthru
      _
    %v27 = vld [vmem:[%s0] sm:$0xff]
    %v28 = vld [vmem:[%s0 + $0x8] sm:$0xff]
    %v29 = vld [vmem:[%s5] ss:$0 sm:$0xff]
    %s30 = scalar_lea.vmem %s5, 1
    %v31 = vld [vmem:[%s30] ss:$8 sm:$0x3]
    %v32 = vld [vmem:[%s5 + $0x2] ss:$0 sm:$0xff]
    %v33 = vld [vmem:[%s5 + $0x3] ss:$0 sm:$0xff]
    %v34 = vld [vmem:[%s5 + $0x4] ss:$0 sm:$0xff]
    %v35 = vld [vmem:[%s5 + $0x5] ss:$0 sm:$0xff]
    %v36 = vld [vmem:[%s6] sm:$0xff]
    %v37 = vld [vmem:[%s6 + $0x8] sm:$0xff]
    %v38 = vld [vmem:[%s6 + $0x10] sm:$0xff]
    %v39 = vld [vmem:[%s6 + $0x18] sm:$0xff]
    %v40 = vld [vmem:[%s6 + $0x20] sm:$0xff]
    %v41 = vld [vmem:[%s6 + $0x28] sm:$0xff]
    %v42 = vld [vmem:[%s6 + $0x30] sm:$0xff]
    %v43 = vld [vmem:[%s6 + $0x38] sm:$0xff]
    %v44 = vld [vmem:[%s6 + $0x40] sm:$0xff]
    %v45 = vld [vmem:[%s6 + $0x48] sm:$0xff]
    %v46 = vld [vmem:[%s6 + $0x50] sm:$0xff]
    %v47 = vld [vmem:[%s6 + $0x58] sm:$0xff]
    %v48 = vmul.f32 %v27, %v27
    %v49 = vmul.f32 %v28, %v28
    %vm50 = vcmask 261120
    %v51 = vsel %vm50, %v48, 0.0
    %52 = vadd.xlane.f32.xlu0 %v51
    %v53 = vpop.xlane.xlu0 %52
    %v54 = vsel %vm50, %v49, 0.0
    %55 = vadd.xlane.f32.xlu0 %v54
    %v56 = vpop.xlane.xlu0 %55
    %v57 = vmul.f32 %v53, 0.03125
    %v58 = vmul.f32 %v56, 0.03125
    %v59 = vadd.f32 %v57, 1e-06
    %v60 = vadd.f32 %v58, 1e-06
    %v61 = vrsqrt.pop %v59
    %v62 = vrsqrt.pop %v60
    %v63 = vmul.f32 %v27, %v61
    %v64 = vmul.f32 %v28, %v62
    %v65 = vmul.f32 %v63, %v29
    %v66 = vmul.f32 %v64, %v29
    %v67 = vld [vmem:[%s1] sm:$0xff]
    %v68 = vld [vmem:[%s1 + $0x8] sm:$0xff]
    %v69 = vld [vmem:[%s1 + $0x10] sm:$0xff]
    %v70 = vld [vmem:[%s1 + $0x18] sm:$0xff]
    %v71 = vld [vmem:[%s1 + $0x20] sm:$0xff]
    %v72 = vld [vmem:[%s1 + $0x28] sm:$0xff]
    %v73 = vld [vmem:[%s1 + $0x30] sm:$0xff]
    %v74 = vld [vmem:[%s1 + $0x38] sm:$0xff]
    %v76 = vlaneseq
    %v77 = vshrl.u32 %v76, 7
    %v78 = vsub.s32 0, %v77
    %v79 = vrot.slane %v31, %v78
    %v80 = vlaneseq
    %v81 = vshrl.u32 %v80, 7
    %v82 = vsub.s32 1, %v81
    %v83 = vrot.slane %v31, %v82
    %v87 = vsel %vm50, %v65, 0
    %v90 = vsel %vm50, %v66, 0
    %92 = vmatprep.subr.mxu0 %v68
    %93 = vmatpush1.msra.mxu0 %v67
    %94 = vmatprep.subr.mxu0 %v70
    %95 = vmatpush1.msra.mxu0 %v69
    %96 = vmatprep.subr.mxu0 %v72
    %97 = vmatpush1.msra.mxu0 %v71
    %98 = vmatprep.subr.mxu0 %v74
    %99 = vmatpush1.msra.mxu0 %v73
    %100 = vmatprep.subr.mxu0 0.0
    %101 = vmatpush1.msra.mxu0 0.0
    %102 = vmatprep.subr.mxu0 0.0
    %103 = vmatpush1.msra.mxu0 0.0
    %104 = vmatprep.subr.mxu0 0.0
    %105 = vmatpush1.msra.mxu0 0.0
    %106 = vmatprep.subr.mxu0 0.0
    %107 = vmatpush1.msra.mxu0 0.0
    %108 = vmatprep.subr.mxu0 0.0
    %109 = vmatpush1.msra.mxu0 0.0
    %110 = vmatprep.subr.mxu0 0.0
    %111 = vmatpush1.msra.mxu0 0.0
    %112 = vmatprep.subr.mxu0 0.0
    %113 = vmatpush1.msra.mxu0 0.0
    %114 = vmatprep.subr.mxu0 0.0
    %115 = vmatpush1.msra.mxu0 0.0
    %116 = vmatprep.subr.mxu0 0.0
    %117 = vmatpush1.msra.mxu0 0.0
    %118 = vmatprep.subr.mxu0 0.0
    %119 = vmatpush1.msra.mxu0 0.0
    %120 = vmatprep.subr.mxu0 0.0
    %121 = vmatpush1.msra.mxu0 0.0
    %122 = vmatprep.subr.mxu0 0.0
    %123 = vmatpush1.msra.mxu0 0.0
    %124 = vmatprep.subr.mxu0 0.0
    %125 = vmatpush1.msra.mxu0 0.0
    %126 = vmatprep.subr.mxu0 0.0
    %127 = vmatpush1.msra.mxu0 0.0
    %128 = vmatprep.subr.mxu0 0.0
    %129 = vmatpush1.msra.mxu0 0.0
    %130 = vmatprep.subr.mxu0 0.0
    %131 = vmatpush1.msra.mxu0 0.0
    %132 = vmatprep.subr.mxu0 0.0
    %133 = vmatpush1.msra.mxu0 0.0
    %134 = vmatprep.subr.mxu0 0.0
    %135 = vmatpush1.msra.mxu0 0.0
    %136 = vmatprep.subr.mxu0 0.0
    %137 = vmatpush1.msra.mxu0 0.0
    %138 = vmatprep.subr.mxu0 0.0
    %139 = vmatpush1.msra.mxu0 0.0
    %140 = vmatprep.subr.mxu0 0.0
    %141 = vmatpush1.msra.mxu0 0.0
    %142 = vmatprep.subr.mxu0 0.0
    %143 = vmatpush1.msra.mxu0 0.0
    %144 = vmatprep.subr.mxu0 0.0
    %145 = vmatpush1.msra.mxu0 0.0
    %146 = vmatprep.subr.mxu0 0.0
    %147 = vmatpush1.msra.mxu0 0.0
    %148 = vmatprep.subr.mxu0 0.0
    %149 = vmatpush1.msra.mxu0 0.0
    %150 = vmatprep.subr.mxu0 0.0
    %151 = vmatpush1.msra.mxu0 0.0
    %152 = vmatprep.subr.mxu0 0.0
    %153 = vmatpush1.msra.mxu0 0.0
    %154 = vmatprep.subr.mxu0 0.0
    %155 = vmatpush1.msra.mxu0 0.0
    %156 = vmatprep.mubr.f32.mxu0 0.0
    %157 = vmatmul.mubr.f32.gmra.mrb[0].mxu0 %v87
    %v158 = vpop.f32.mrb[0].mxu0
    %v159 = vadd.f32 %v79, %v158
    %v160 = vpop.f32.mrb[0].mxu0
    %v161 = vadd.f32 %v83, %v160
    %162 = vmatprep.mubr.f32.mxu0 0.0
    %163 = vmatmul.mubr.f32.gmra.mrb[0].mxu0 %v90
    %v164 = vpop.f32.mrb[0].mxu0
    %v165 = vadd.f32 %v79, %v164
    %v166 = vpop.f32.mrb[0].mxu0
    %v167 = vadd.f32 %v83, %v166
    %168 = vdwg.mxu0
    %v169 = vmul.f32 %v159, %v36
    %v170 = vmul.f32 %v165, %v37
    %173 = vrot.lane.b32.xlu0 %v38, 96
    %v174 = vpop.permute.xlu0 %173
    %175 = vrot.lane.b32.xlu0 %v39, 96
    %v176 = vpop.permute.xlu0 %175
    %v179 = vmul.f32 %v159, %v174
    %v180 = vmul.f32 %v165, %v176
    %183 = vrot.lane.b32.xlu0 %v179, 32
    %v184 = vpop.permute.xlu0 %183
    %185 = vrot.lane.b32.xlu0 %v180, 32
    %v186 = vpop.permute.xlu0 %185
    %v189 = vadd.f32 %v169, %v184
    %v190 = vadd.f32 %v170, %v186
    %193 = vrot.lane.b32.xlu0 %v36, 32
    %v194 = vpop.permute.xlu0 %193
    %195 = vrot.lane.b32.xlu0 %v37, 32
    %v196 = vpop.permute.xlu0 %195
    %v199 = vmul.f32 %v159, %v194
    %v200 = vmul.f32 %v165, %v196
    %v201 = vmul.f32 %v161, %v38
    %v202 = vmul.f32 %v167, %v39
    %205 = vrot.lane.b32.xlu0 %v201, 32
    %v206 = vpop.permute.xlu0 %205
    %207 = vrot.lane.b32.xlu0 %v202, 32
    %v208 = vpop.permute.xlu0 %207
    %v211 = vadd.f32 %v199, %v206
    %v212 = vadd.f32 %v200, %v208
    %215 = vrot.lane.b32.xlu0 %v189, 120
    %v216 = vpop.permute.xlu0 %215
    %217 = vrot.lane.b32.xlu0 %v190, 120
    %v218 = vpop.permute.xlu0 %217
    %219 = vrot.lane.b32.xlu0 %v189, 112
    %v220 = vpop.permute.xlu0 %219
    %221 = vrot.lane.b32.xlu0 %v190, 112
    %v222 = vpop.permute.xlu0 %221
    %223 = vrot.lane.b32.xlu0 %v189, 104
    %v224 = vpop.permute.xlu0 %223
    %225 = vrot.lane.b32.xlu0 %v190, 104
    %v226 = vpop.permute.xlu0 %225
    %229 = vrot.lane.b32.xlu0 %v211, 120
    %v230 = vpop.permute.xlu0 %229
    %231 = vrot.lane.b32.xlu0 %v212, 120
    %v232 = vpop.permute.xlu0 %231
    %233 = vrot.lane.b32.xlu0 %v211, 112
    %v234 = vpop.permute.xlu0 %233
    %235 = vrot.lane.b32.xlu0 %v212, 112
    %v236 = vpop.permute.xlu0 %235
    %237 = vrot.lane.b32.xlu0 %v211, 104
    %v238 = vpop.permute.xlu0 %237
    %239 = vrot.lane.b32.xlu0 %v212, 104
    %v240 = vpop.permute.xlu0 %239
    %243 = vrot.lane.b32.xlu0 %v159, 120
    %v244 = vpop.permute.xlu0 %243
    %245 = vrot.lane.b32.xlu0 %v165, 120
    %v246 = vpop.permute.xlu0 %245
    %247 = vrot.lane.b32.xlu0 %v159, 112
    %v248 = vpop.permute.xlu0 %247
    %249 = vrot.lane.b32.xlu0 %v165, 112
    %v250 = vpop.permute.xlu0 %249
    %251 = vrot.lane.b32.xlu0 %v159, 104
    %v252 = vpop.permute.xlu0 %251
    %253 = vrot.lane.b32.xlu0 %v165, 104
    %v254 = vpop.permute.xlu0 %253
    %255 = vrot.lane.b32.xlu0 %v211, 96
    %v256 = vpop.permute.xlu0 %255
    %257 = vrot.lane.b32.xlu0 %v212, 96
    %v258 = vpop.permute.xlu0 %257
    %259 = vrot.lane.b32.xlu0 %v230, 96
    %v260 = vpop.permute.xlu0 %259
    %261 = vrot.lane.b32.xlu0 %v232, 96
    %v262 = vpop.permute.xlu0 %261
    %263 = vrot.lane.b32.xlu0 %v234, 96
    %v264 = vpop.permute.xlu0 %263
    %265 = vrot.lane.b32.xlu0 %v236, 96
    %v266 = vpop.permute.xlu0 %265
    %267 = vrot.lane.b32.xlu0 %v238, 96
    %v268 = vpop.permute.xlu0 %267
    %269 = vrot.lane.b32.xlu0 %v240, 96
    %v270 = vpop.permute.xlu0 %269
    %vm271 = vcmask 64512
    %v272 = vsel %vm271, %v189, 0
    %v274 = vsel %vm271, %v190, 0
    %v276 = vsel %vm271, %v216, 0
    %v278 = vsel %vm271, %v218, 0
    %v280 = vsel %vm271, %v220, 0
    %v282 = vsel %vm271, %v222, 0
    %v284 = vsel %vm271, %v224, 0
    %v286 = vsel %vm271, %v226, 0
    %v288 = vsel %vm271, %v256, 0
    %v290 = vsel %vm271, %v258, 0
    %v292 = vsel %vm271, %v260, 0
    %v294 = vsel %vm271, %v262, 0
    %v296 = vsel %vm271, %v264, 0
    %v298 = vsel %vm271, %v266, 0
    %v300 = vsel %vm271, %v268, 0
    %v302 = vsel %vm271, %v270, 0
    %304 = vmatprep.subr.mxu0 0.0
    %305 = vmatpush1.xpose.msra.mxu0 %v288
    %306 = vmatprep.subr.mxu0 0.0
    %307 = vmatpush1.xpose.msra.mxu0 %v290
    %308 = vmatprep.subr.mxu0 0.0
    %309 = vmatpush1.xpose.msra.mxu0 %v292
    %310 = vmatprep.subr.mxu0 0.0
    %311 = vmatpush1.xpose.msra.mxu0 %v294
    %312 = vmatprep.subr.mxu0 0.0
    %313 = vmatpush1.xpose.msra.mxu0 %v296
    %314 = vmatprep.subr.mxu0 0.0
    %315 = vmatpush1.xpose.msra.mxu0 %v298
    %316 = vmatprep.subr.mxu0 0.0
    %317 = vmatpush1.xpose.msra.mxu0 %v300
    %318 = vmatprep.subr.mxu0 0.0
    %319 = vmatpush1.xpose.msra.mxu0 %v302
    %320 = vmatprep.subr.mxu0 0.0
    %321 = vmatpush1.xpose.msra.mxu0 0.0
    %322 = vmatprep.subr.mxu0 0.0
    %323 = vmatpush1.xpose.msra.mxu0 0.0
    %324 = vmatprep.subr.mxu0 0.0
    %325 = vmatpush1.xpose.msra.mxu0 0.0
    %326 = vmatprep.subr.mxu0 0.0
    %327 = vmatpush1.xpose.msra.mxu0 0.0
    %328 = vmatprep.subr.mxu0 0.0
    %329 = vmatpush1.xpose.msra.mxu0 0.0
    %330 = vmatprep.subr.mxu0 0.0
    %331 = vmatpush1.xpose.msra.mxu0 0.0
    %332 = vmatprep.subr.mxu0 0.0
    %333 = vmatpush1.xpose.msra.mxu0 0.0
    %334 = vmatprep.subr.mxu0 0.0
    %335 = vmatpush1.xpose.msra.mxu0 0.0
    %336 = vmatprep.subr.mxu0 0.0
    %337 = vmatpush1.xpose.msra.mxu0 0.0
    %338 = vmatprep.subr.mxu0 0.0
    %339 = vmatpush1.xpose.msra.mxu0 0.0
    %340 = vmatprep.subr.mxu0 0.0
    %341 = vmatpush1.xpose.msra.mxu0 0.0
    %342 = vmatprep.subr.mxu0 0.0
    %343 = vmatpush1.xpose.msra.mxu0 0.0
    %344 = vmatprep.subr.mxu0 0.0
    %345 = vmatpush1.xpose.msra.mxu0 0.0
    %346 = vmatprep.subr.mxu0 0.0
    %347 = vmatpush1.xpose.msra.mxu0 0.0
    %348 = vmatprep.subr.mxu0 0.0
    %349 = vmatpush1.xpose.msra.mxu0 0.0
    %350 = vmatprep.subr.mxu0 0.0
    %351 = vmatpush1.xpose.msra.mxu0 0.0
    %352 = vmatprep.subr.mxu0 0.0
    %353 = vmatpush1.xpose.msra.mxu0 0.0
    %354 = vmatprep.subr.mxu0 0.0
    %355 = vmatpush1.xpose.msra.mxu0 0.0
    %356 = vmatprep.subr.mxu0 0.0
    %357 = vmatpush1.xpose.msra.mxu0 0.0
    %358 = vmatprep.subr.mxu0 0.0
    %359 = vmatpush1.xpose.msra.mxu0 0.0
    %360 = vmatprep.subr.mxu0 0.0
    %361 = vmatpush1.xpose.msra.mxu0 0.0
    %362 = vmatprep.subr.mxu0 0.0
    %363 = vmatpush1.xpose.msra.mxu0 0.0
    %364 = vmatprep.subr.mxu0 0.0
    %365 = vmatpush1.xpose.msra.mxu0 0.0
    %366 = vmatprep.subr.mxu0 0.0
    %367 = vmatpush1.xpose.msra.mxu0 0.0
    %368 = vmatprep.mubr.f32.mxu0 0.0
    %369 = vmatmul.mubr.f32.gmra.mrb[0].mxu0 %v272
    %v370 = vpop.f32.mrb[0].mxu0
    %v371 = vadd.f32 %v40, %v370
    %v372 = vpop.f32.mrb[0].mxu0
    %373 = vmatprep.mubr.f32.mxu0 0.0
    %374 = vmatmul.mubr.f32.gmra.mrb[0].mxu0 %v274
    %v375 = vpop.f32.mrb[0].mxu0
    %v376 = vadd.f32 %v41, %v375
    %v377 = vpop.f32.mrb[0].mxu0
    %378 = vmatprep.mubr.f32.mxu0 0.0
    %379 = vmatmul.mubr.f32.gmra.mrb[0].mxu0 %v276
    %v380 = vpop.f32.mrb[0].mxu0
    %v381 = vadd.f32 %v42, %v380
    %v382 = vpop.f32.mrb[0].mxu0
    %383 = vmatprep.mubr.f32.mxu0 0.0
    %384 = vmatmul.mubr.f32.gmra.mrb[0].mxu0 %v278
    %v385 = vpop.f32.mrb[0].mxu0
    %v386 = vadd.f32 %v43, %v385
    %v387 = vpop.f32.mrb[0].mxu0
    %388 = vmatprep.mubr.f32.mxu0 0.0
    %389 = vmatmul.mubr.f32.gmra.mrb[0].mxu0 %v280
    %v390 = vpop.f32.mrb[0].mxu0
    %v391 = vadd.f32 %v44, %v390
    %v392 = vpop.f32.mrb[0].mxu0
    %393 = vmatprep.mubr.f32.mxu0 0.0
    %394 = vmatmul.mubr.f32.gmra.mrb[0].mxu0 %v282
    %v395 = vpop.f32.mrb[0].mxu0
    %v396 = vadd.f32 %v45, %v395
    %v397 = vpop.f32.mrb[0].mxu0
    %398 = vmatprep.mubr.f32.mxu0 0.0
    %399 = vmatmul.mubr.f32.gmra.mrb[0].mxu0 %v284
    %v400 = vpop.f32.mrb[0].mxu0
    %v401 = vadd.f32 %v46, %v400
    %v402 = vpop.f32.mrb[0].mxu0
    %403 = vmatprep.mubr.f32.mxu0 0.0
    %404 = vmatmul.mubr.f32.gmra.mrb[0].mxu0 %v286
    %v405 = vpop.f32.mrb[0].mxu0
    %v406 = vadd.f32 %v47, %v405
    %v407 = vpop.f32.mrb[0].mxu0
    %408 = vdwg.mxu0
    %vm409 = vcmask 523264
    %v410 = vsel %vm409, %v371, -inf
    %411 = vmax.xlane.f32.xlu0 %v410
    %v412 = vpop.xlane.xlu0 %411
    %v413 = vsel %vm409, %v376, -inf
    %414 = vmax.xlane.f32.xlu0 %v413
    %v415 = vpop.xlane.xlu0 %414
    %v416 = vsel %vm409, %v381, -inf
    %417 = vmax.xlane.f32.xlu0 %v416
    %v418 = vpop.xlane.xlu0 %417
    %v419 = vsel %vm409, %v386, -inf
    %420 = vmax.xlane.f32.xlu0 %v419
    %v421 = vpop.xlane.xlu0 %420
    %v422 = vsel %vm409, %v391, -inf
    %423 = vmax.xlane.f32.xlu0 %v422
    %v424 = vpop.xlane.xlu0 %423
    %v425 = vsel %vm409, %v396, -inf
    %426 = vmax.xlane.f32.xlu0 %v425
    %v427 = vpop.xlane.xlu0 %426
    %v428 = vsel %vm409, %v401, -inf
    %429 = vmax.xlane.f32.xlu0 %v428
    %v430 = vpop.xlane.xlu0 %429
    %v431 = vsel %vm409, %v406, -inf
    %432 = vmax.xlane.f32.xlu0 %v431
    %v433 = vpop.xlane.xlu0 %432
    %v434 = vsub.f32 %v371, %v412
    %v435 = vsub.f32 %v376, %v415
    %v436 = vsub.f32 %v381, %v418
    %v437 = vsub.f32 %v386, %v421
    %v438 = vsub.f32 %v391, %v424
    %v439 = vsub.f32 %v396, %v427
    %v440 = vsub.f32 %v401, %v430
    %v441 = vsub.f32 %v406, %v433
    %v442 = vmul.f32 %v434, 1.442695
    %v443 = vpow.pop %v442
    %v444 = vmul.f32 %v435, 1.442695
    %v445 = vpow.pop %v444
    %v446 = vmul.f32 %v436, 1.442695
    %v447 = vpow.pop %v446
    %v448 = vmul.f32 %v437, 1.442695
    %v449 = vpow.pop %v448
    %v450 = vmul.f32 %v438, 1.442695
    %v451 = vpow.pop %v450
    %v452 = vmul.f32 %v439, 1.442695
    %v453 = vpow.pop %v452
    %v454 = vmul.f32 %v440, 1.442695
    %v455 = vpow.pop %v454
    %v456 = vmul.f32 %v441, 1.442695
    %v457 = vpow.pop %v456
    %v458 = vsel %vm409, %v443, 0.0
    %459 = vadd.xlane.f32.xlu0 %v458
    %v460 = vpop.xlane.xlu0 %459
    %v461 = vsel %vm409, %v445, 0.0
    %462 = vadd.xlane.f32.xlu0 %v461
    %v463 = vpop.xlane.xlu0 %462
    %v464 = vsel %vm409, %v447, 0.0
    %465 = vadd.xlane.f32.xlu0 %v464
    %v466 = vpop.xlane.xlu0 %465
    %v467 = vsel %vm409, %v449, 0.0
    %468 = vadd.xlane.f32.xlu0 %v467
    %v469 = vpop.xlane.xlu0 %468
    %v470 = vsel %vm409, %v451, 0.0
    %471 = vadd.xlane.f32.xlu0 %v470
    %v472 = vpop.xlane.xlu0 %471
    %v473 = vsel %vm409, %v453, 0.0
    %474 = vadd.xlane.f32.xlu0 %v473
    %v475 = vpop.xlane.xlu0 %474
    %v476 = vsel %vm409, %v455, 0.0
    %477 = vadd.xlane.f32.xlu0 %v476
    %v478 = vpop.xlane.xlu0 %477
    %v479 = vsel %vm409, %v457, 0.0
    %480 = vadd.xlane.f32.xlu0 %v479
    %v481 = vpop.xlane.xlu0 %480
    %v482 = vrcp.pop %v460
    %v483 = vrcp.pop %v463
    %v484 = vrcp.pop %v466
    %v485 = vrcp.pop %v469
    %v486 = vrcp.pop %v472
    %v487 = vrcp.pop %v475
    %v488 = vrcp.pop %v478
    %v489 = vrcp.pop %v481
    %v490 = vmul.f32 %v443, %v482
    %v491 = vmul.f32 %v445, %v483
    %v492 = vmul.f32 %v447, %v484
    %v493 = vmul.f32 %v449, %v485
    %v494 = vmul.f32 %v451, %v486
    %v495 = vmul.f32 %v453, %v487
    %v496 = vmul.f32 %v455, %v488
    %v497 = vmul.f32 %v457, %v489
    %498 = vrot.lane.b32.xlu0 %v159, 64
    %v499 = vpop.permute.xlu0 %498
    %500 = vrot.lane.b32.xlu0 %v165, 64
    %v501 = vpop.permute.xlu0 %500
    %502 = vrot.lane.b32.xlu0 %v244, 64
    %v503 = vpop.permute.xlu0 %502
    %504 = vrot.lane.b32.xlu0 %v246, 64
    %v505 = vpop.permute.xlu0 %504
    %506 = vrot.lane.b32.xlu0 %v248, 64
    %v507 = vpop.permute.xlu0 %506
    %508 = vrot.lane.b32.xlu0 %v250, 64
    %v509 = vpop.permute.xlu0 %508
    %510 = vrot.lane.b32.xlu0 %v252, 64
    %v511 = vpop.permute.xlu0 %510
    %512 = vrot.lane.b32.xlu0 %v254, 64
    %v513 = vpop.permute.xlu0 %512
    %v523 = vsel %vm409, %v490, 0
    %v526 = vsel %vm409, %v491, 0
    %v529 = vsel %vm409, %v492, 0
    %v532 = vsel %vm409, %v493, 0
    %v535 = vsel %vm409, %v494, 0
    %v538 = vsel %vm409, %v495, 0
    %v541 = vsel %vm409, %v496, 0
    %v544 = vsel %vm409, %v497, 0
    %546 = vmatprep.subr.mxu0 0.0
    %547 = vmatpush1.msra.mxu0 %v499
    %548 = vmatprep.subr.mxu0 0.0
    %549 = vmatpush1.msra.mxu0 %v501
    %550 = vmatprep.subr.mxu0 0.0
    %551 = vmatpush1.msra.mxu0 %v503
    %552 = vmatprep.subr.mxu0 0.0
    %553 = vmatpush1.msra.mxu0 %v505
    %554 = vmatprep.subr.mxu0 0.0
    %555 = vmatpush1.msra.mxu0 %v507
    %556 = vmatprep.subr.mxu0 0.0
    %557 = vmatpush1.msra.mxu0 %v509
    %558 = vmatprep.subr.mxu0 0.0
    %559 = vmatpush1.msra.mxu0 %v511
    %560 = vmatprep.subr.mxu0 0.0
    %561 = vmatpush1.msra.mxu0 %v513
    %562 = vmatprep.subr.mxu0 0.0
    %563 = vmatpush1.msra.mxu0 0.0
    %564 = vmatprep.subr.mxu0 0.0
    %565 = vmatpush1.msra.mxu0 0.0
    %566 = vmatprep.subr.mxu0 0.0
    %567 = vmatpush1.msra.mxu0 0.0
    %568 = vmatprep.subr.mxu0 0.0
    %569 = vmatpush1.msra.mxu0 0.0
    %570 = vmatprep.subr.mxu0 0.0
    %571 = vmatpush1.msra.mxu0 0.0
    %572 = vmatprep.subr.mxu0 0.0
    %573 = vmatpush1.msra.mxu0 0.0
    %574 = vmatprep.subr.mxu0 0.0
    %575 = vmatpush1.msra.mxu0 0.0
    %576 = vmatprep.subr.mxu0 0.0
    %577 = vmatpush1.msra.mxu0 0.0
    %578 = vmatprep.subr.mxu0 0.0
    %579 = vmatpush1.msra.mxu0 0.0
    %580 = vmatprep.subr.mxu0 0.0
    %581 = vmatpush1.msra.mxu0 0.0
    %582 = vmatprep.subr.mxu0 0.0
    %583 = vmatpush1.msra.mxu0 0.0
    %584 = vmatprep.subr.mxu0 0.0
    %585 = vmatpush1.msra.mxu0 0.0
    %586 = vmatprep.subr.mxu0 0.0
    %587 = vmatpush1.msra.mxu0 0.0
    %588 = vmatprep.subr.mxu0 0.0
    %589 = vmatpush1.msra.mxu0 0.0
    %590 = vmatprep.subr.mxu0 0.0
    %591 = vmatpush1.msra.mxu0 0.0
    %592 = vmatprep.subr.mxu0 0.0
    %593 = vmatpush1.msra.mxu0 0.0
    %594 = vmatprep.subr.mxu0 0.0
    %595 = vmatpush1.msra.mxu0 0.0
    %596 = vmatprep.subr.mxu0 0.0
    %597 = vmatpush1.msra.mxu0 0.0
    %598 = vmatprep.subr.mxu0 0.0
    %599 = vmatpush1.msra.mxu0 0.0
    %600 = vmatprep.subr.mxu0 0.0
    %601 = vmatpush1.msra.mxu0 0.0
    %602 = vmatprep.subr.mxu0 0.0
    %603 = vmatpush1.msra.mxu0 0.0
    %604 = vmatprep.subr.mxu0 0.0
    %605 = vmatpush1.msra.mxu0 0.0
    %606 = vmatprep.subr.mxu0 0.0
    %607 = vmatpush1.msra.mxu0 0.0
    %608 = vmatprep.subr.mxu0 0.0
    %609 = vmatpush1.msra.mxu0 0.0
    %610 = vmatprep.mubr.f32.mxu0 0.0
    %611 = vmatmul.mubr.f32.gmra.mrb[0].mxu0 %v523
    %v612 = vpop.f32.mrb[0].mxu0
    %v613 = vadd.f32 0.0, %v612
    %v614 = vpop.f32.mrb[0].mxu0
    %615 = vmatprep.mubr.f32.mxu0 0.0
    %616 = vmatmul.mubr.f32.gmra.mrb[0].mxu0 %v526
    %v617 = vpop.f32.mrb[0].mxu0
    %v618 = vadd.f32 0.0, %v617
    %v619 = vpop.f32.mrb[0].mxu0
    %620 = vmatprep.mubr.f32.mxu0 0.0
    %621 = vmatmul.mubr.f32.gmra.mrb[0].mxu0 %v529
    %v622 = vpop.f32.mrb[0].mxu0
    %v623 = vadd.f32 0.0, %v622
    %v624 = vpop.f32.mrb[0].mxu0
    %625 = vmatprep.mubr.f32.mxu0 0.0
    %626 = vmatmul.mubr.f32.gmra.mrb[0].mxu0 %v532
    %v627 = vpop.f32.mrb[0].mxu0
    %v628 = vadd.f32 0.0, %v627
    %v629 = vpop.f32.mrb[0].mxu0
    %630 = vmatprep.mubr.f32.mxu0 0.0
    %631 = vmatmul.mubr.f32.gmra.mrb[0].mxu0 %v535
    %v632 = vpop.f32.mrb[0].mxu0
    %v633 = vadd.f32 0.0, %v632
    %v634 = vpop.f32.mrb[0].mxu0
    %635 = vmatprep.mubr.f32.mxu0 0.0
    %636 = vmatmul.mubr.f32.gmra.mrb[0].mxu0 %v538
    %v637 = vpop.f32.mrb[0].mxu0
    %v638 = vadd.f32 0.0, %v637
    %v639 = vpop.f32.mrb[0].mxu0
    %640 = vmatprep.mubr.f32.mxu0 0.0
    %641 = vmatmul.mubr.f32.gmra.mrb[0].mxu0 %v541
    %v642 = vpop.f32.mrb[0].mxu0
    %v643 = vadd.f32 0.0, %v642
    %v644 = vpop.f32.mrb[0].mxu0
    %645 = vmatprep.mubr.f32.mxu0 0.0
    %646 = vmatmul.mubr.f32.gmra.mrb[0].mxu0 %v544
    %v647 = vpop.f32.mrb[0].mxu0
    %v648 = vadd.f32 0.0, %v647
    %v649 = vpop.f32.mrb[0].mxu0
    %650 = vdwg.mxu0
    %v651 = vld [vmem:[%s2] sm:$0xff]
    %v652 = vld [vmem:[%s2 + $0x8] sm:$0xff]
    %v654 = vsel %vm271, %v623, 0
    %v657 = vsel %vm271, %v628, 0
    %659 = vmatprep.subr.mxu0 0.0
    %660 = vmatpush1.msra.mxu0 %v652
    %661 = vmatprep.subr.mxu0 0.0
    %662 = vmatpush1.msra.mxu0 0.0
    %663 = vmatprep.subr.mxu0 0.0
    %664 = vmatpush1.msra.mxu0 0.0
    %665 = vmatprep.subr.mxu0 0.0
    %666 = vmatpush1.msra.mxu0 0.0
    %667 = vmatprep.subr.mxu0 0.0
    %668 = vmatpush1.msra.mxu0 0.0
    %669 = vmatprep.subr.mxu0 0.0
    %670 = vmatpush1.msra.mxu0 0.0
    %671 = vmatprep.subr.mxu0 0.0
    %672 = vmatpush1.msra.mxu0 0.0
    %673 = vmatprep.subr.mxu0 0.0
    %674 = vmatpush1.msra.mxu0 0.0
    %675 = vmatprep.subr.mxu0 0.0
    %676 = vmatpush1.msra.mxu0 0.0
    %677 = vmatprep.subr.mxu0 0.0
    %678 = vmatpush1.msra.mxu0 0.0
    %679 = vmatprep.subr.mxu0 0.0
    %680 = vmatpush1.msra.mxu0 0.0
    %681 = vmatprep.subr.mxu0 0.0
    %682 = vmatpush1.msra.mxu0 0.0
    %683 = vmatprep.subr.mxu0 0.0
    %684 = vmatpush1.msra.mxu0 0.0
    %685 = vmatprep.subr.mxu0 0.0
    %686 = vmatpush1.msra.mxu0 0.0
    %687 = vmatprep.subr.mxu0 0.0
    %688 = vmatpush1.msra.mxu0 0.0
    %689 = vmatprep.subr.mxu0 0.0
    %690 = vmatpush1.msra.mxu0 0.0
    %691 = vmatprep.subr.mxu0 0.0
    %692 = vmatpush1.msra.mxu0 0.0
    %693 = vmatprep.subr.mxu0 0.0
    %694 = vmatpush1.msra.mxu0 0.0
    %695 = vmatprep.subr.mxu0 0.0
    %696 = vmatpush1.msra.mxu0 0.0
    %697 = vmatprep.subr.mxu0 0.0
    %698 = vmatpush1.msra.mxu0 0.0
    %699 = vmatprep.subr.mxu0 0.0
    %700 = vmatpush1.msra.mxu0 0.0
    %701 = vmatprep.subr.mxu0 0.0
    %702 = vmatpush1.msra.mxu0 0.0
    %703 = vmatprep.subr.mxu0 0.0
    %704 = vmatpush1.msra.mxu0 0.0
    %705 = vmatprep.subr.mxu0 0.0
    %706 = vmatpush1.msra.mxu0 0.0
    %707 = vmatprep.subr.mxu0 0.0
    %708 = vmatpush1.msra.mxu0 0.0
    %709 = vmatprep.subr.mxu0 0.0
    %710 = vmatpush1.msra.mxu0 0.0
    %711 = vmatprep.subr.mxu0 0.0
    %712 = vmatpush1.msra.mxu0 0.0
    %713 = vmatprep.subr.mxu0 0.0
    %714 = vmatpush1.msra.mxu0 0.0
    %715 = vmatprep.subr.mxu0 0.0
    %716 = vmatpush1.msra.mxu0 0.0
    %717 = vmatprep.subr.mxu0 0.0
    %718 = vmatpush1.msra.mxu0 0.0
    %719 = vmatprep.subr.mxu0 0.0
    %720 = vmatpush1.msra.mxu0 0.0
    %721 = vmatprep.subr.mxu0 0.0
    %722 = vmatpush1.msra.mxu0 0.0
    %723 = vmatprep.mubr.f32.mxu0 0.0
    %724 = vmatmul.mubr.f32.gmra.mrb[0].mxu0 %v654
    %v725 = vpop.f32.mrb[0].mxu0
    %v726 = vadd.f32 0.0, %v725
    %v727 = vpop.f32.mrb[0].mxu0
    %728 = vmatprep.mubr.f32.mxu0 0.0
    %729 = vmatmul.mubr.f32.gmra.mrb[0].mxu0 %v657
    %v730 = vpop.f32.mrb[0].mxu0
    %v731 = vadd.f32 0.0, %v730
    %v732 = vpop.f32.mrb[0].mxu0
    %733 = vdwg.mxu0
    %v735 = vsel %vm271, %v613, 0
    %v738 = vsel %vm271, %v618, 0
    %740 = vmatprep.subr.mxu0 0.0
    %741 = vmatpush1.msra.mxu0 %v651
    %742 = vmatprep.subr.mxu0 0.0
    %743 = vmatpush1.msra.mxu0 0.0
    %744 = vmatprep.subr.mxu0 0.0
    %745 = vmatpush1.msra.mxu0 0.0
    %746 = vmatprep.subr.mxu0 0.0
    %747 = vmatpush1.msra.mxu0 0.0
    %748 = vmatprep.subr.mxu0 0.0
    %749 = vmatpush1.msra.mxu0 0.0
    %750 = vmatprep.subr.mxu0 0.0
    %751 = vmatpush1.msra.mxu0 0.0
    %752 = vmatprep.subr.mxu0 0.0
    %753 = vmatpush1.msra.mxu0 0.0
    %754 = vmatprep.subr.mxu0 0.0
    %755 = vmatpush1.msra.mxu0 0.0
    %756 = vmatprep.subr.mxu0 0.0
    %757 = vmatpush1.msra.mxu0 0.0
    %758 = vmatprep.subr.mxu0 0.0
    %759 = vmatpush1.msra.mxu0 0.0
    %760 = vmatprep.subr.mxu0 0.0
    %761 = vmatpush1.msra.mxu0 0.0
    %762 = vmatprep.subr.mxu0 0.0
    %763 = vmatpush1.msra.mxu0 0.0
    %764 = vmatprep.subr.mxu0 0.0
    %765 = vmatpush1.msra.mxu0 0.0
    %766 = vmatprep.subr.mxu0 0.0
    %767 = vmatpush1.msra.mxu0 0.0
    %768 = vmatprep.subr.mxu0 0.0
    %769 = vmatpush1.msra.mxu0 0.0
    %770 = vmatprep.subr.mxu0 0.0
    %771 = vmatpush1.msra.mxu0 0.0
    %772 = vmatprep.subr.mxu0 0.0
    %773 = vmatpush1.msra.mxu0 0.0
    %774 = vmatprep.subr.mxu0 0.0
    %775 = vmatpush1.msra.mxu0 0.0
    %776 = vmatprep.subr.mxu0 0.0
    %777 = vmatpush1.msra.mxu0 0.0
    %778 = vmatprep.subr.mxu0 0.0
    %779 = vmatpush1.msra.mxu0 0.0
    %780 = vmatprep.subr.mxu0 0.0
    %781 = vmatpush1.msra.mxu0 0.0
    %782 = vmatprep.subr.mxu0 0.0
    %783 = vmatpush1.msra.mxu0 0.0
    %784 = vmatprep.subr.mxu0 0.0
    %785 = vmatpush1.msra.mxu0 0.0
    %786 = vmatprep.subr.mxu0 0.0
    %787 = vmatpush1.msra.mxu0 0.0
    %788 = vmatprep.subr.mxu0 0.0
    %789 = vmatpush1.msra.mxu0 0.0
    %790 = vmatprep.subr.mxu0 0.0
    %791 = vmatpush1.msra.mxu0 0.0
    %792 = vmatprep.subr.mxu0 0.0
    %793 = vmatpush1.msra.mxu0 0.0
    %794 = vmatprep.subr.mxu0 0.0
    %795 = vmatpush1.msra.mxu0 0.0
    %796 = vmatprep.subr.mxu0 0.0
    %797 = vmatpush1.msra.mxu0 0.0
    %798 = vmatprep.subr.mxu0 0.0
    %799 = vmatpush1.msra.mxu0 0.0
    %800 = vmatprep.subr.mxu0 0.0
    %801 = vmatpush1.msra.mxu0 0.0
    %802 = vmatprep.subr.mxu0 0.0
    %803 = vmatpush1.msra.mxu0 0.0
    %804 = vmatprep.mubr.f32.mxu0 0.0
    %805 = vmatmul.mubr.f32.gmra.mrb[0].mxu0 %v735
    %v806 = vpop.f32.mrb[0].mxu0
    %v807 = vadd.f32 %v726, %v806
    %v808 = vpop.f32.mrb[0].mxu0
    %809 = vmatprep.mubr.f32.mxu0 0.0
    %810 = vmatmul.mubr.f32.gmra.mrb[0].mxu0 %v738
    %v811 = vpop.f32.mrb[0].mxu0
    %v812 = vadd.f32 %v731, %v811
    %v813 = vpop.f32.mrb[0].mxu0
    %814 = vdwg.mxu0
    %v815 = vld [vmem:[%s2 + $0x10] sm:$0xff]
    %v817 = vsel %vm271, %v633, 0
    %v820 = vsel %vm271, %v638, 0
    %822 = vmatprep.subr.mxu0 0.0
    %823 = vmatpush1.msra.mxu0 %v815
    %824 = vmatprep.subr.mxu0 0.0
    %825 = vmatpush1.msra.mxu0 0.0
    %826 = vmatprep.subr.mxu0 0.0
    %827 = vmatpush1.msra.mxu0 0.0
    %828 = vmatprep.subr.mxu0 0.0
    %829 = vmatpush1.msra.mxu0 0.0
    %830 = vmatprep.subr.mxu0 0.0
    %831 = vmatpush1.msra.mxu0 0.0
    %832 = vmatprep.subr.mxu0 0.0
    %833 = vmatpush1.msra.mxu0 0.0
    %834 = vmatprep.subr.mxu0 0.0
    %835 = vmatpush1.msra.mxu0 0.0
    %836 = vmatprep.subr.mxu0 0.0
    %837 = vmatpush1.msra.mxu0 0.0
    %838 = vmatprep.subr.mxu0 0.0
    %839 = vmatpush1.msra.mxu0 0.0
    %840 = vmatprep.subr.mxu0 0.0
    %841 = vmatpush1.msra.mxu0 0.0
    %842 = vmatprep.subr.mxu0 0.0
    %843 = vmatpush1.msra.mxu0 0.0
    %844 = vmatprep.subr.mxu0 0.0
    %845 = vmatpush1.msra.mxu0 0.0
    %846 = vmatprep.subr.mxu0 0.0
    %847 = vmatpush1.msra.mxu0 0.0
    %848 = vmatprep.subr.mxu0 0.0
    %849 = vmatpush1.msra.mxu0 0.0
    %850 = vmatprep.subr.mxu0 0.0
    %851 = vmatpush1.msra.mxu0 0.0
    %852 = vmatprep.subr.mxu0 0.0
    %853 = vmatpush1.msra.mxu0 0.0
    %854 = vmatprep.subr.mxu0 0.0
    %855 = vmatpush1.msra.mxu0 0.0
    %856 = vmatprep.subr.mxu0 0.0
    %857 = vmatpush1.msra.mxu0 0.0
    %858 = vmatprep.subr.mxu0 0.0
    %859 = vmatpush1.msra.mxu0 0.0
    %860 = vmatprep.subr.mxu0 0.0
    %861 = vmatpush1.msra.mxu0 0.0
    %862 = vmatprep.subr.mxu0 0.0
    %863 = vmatpush1.msra.mxu0 0.0
    %864 = vmatprep.subr.mxu0 0.0
    %865 = vmatpush1.msra.mxu0 0.0
    %866 = vmatprep.subr.mxu0 0.0
    %867 = vmatpush1.msra.mxu0 0.0
    %868 = vmatprep.subr.mxu0 0.0
    %869 = vmatpush1.msra.mxu0 0.0
    %870 = vmatprep.subr.mxu0 0.0
    %871 = vmatpush1.msra.mxu0 0.0
    %872 = vmatprep.subr.mxu0 0.0
    %873 = vmatpush1.msra.mxu0 0.0
    %874 = vmatprep.subr.mxu0 0.0
    %875 = vmatpush1.msra.mxu0 0.0
    %876 = vmatprep.subr.mxu0 0.0
    %877 = vmatpush1.msra.mxu0 0.0
    %878 = vmatprep.subr.mxu0 0.0
    %879 = vmatpush1.msra.mxu0 0.0
    %880 = vmatprep.subr.mxu0 0.0
    %881 = vmatpush1.msra.mxu0 0.0
    %882 = vmatprep.subr.mxu0 0.0
    %883 = vmatpush1.msra.mxu0 0.0
    %884 = vmatprep.subr.mxu0 0.0
    %885 = vmatpush1.msra.mxu0 0.0
    %886 = vmatprep.mubr.f32.mxu0 0.0
    %887 = vmatmul.mubr.f32.gmra.mrb[0].mxu0 %v817
    %v888 = vpop.f32.mrb[0].mxu0
    %v889 = vadd.f32 0.0, %v888
    %v890 = vpop.f32.mrb[0].mxu0
    %891 = vmatprep.mubr.f32.mxu0 0.0
    %892 = vmatmul.mubr.f32.gmra.mrb[0].mxu0 %v820
    %v893 = vpop.f32.mrb[0].mxu0
    %v894 = vadd.f32 0.0, %v893
    %v895 = vpop.f32.mrb[0].mxu0
    %896 = vdwg.mxu0
    %v897 = vadd.f32 %v807, %v889
    %v898 = vadd.f32 %v812, %v894
    %v899 = vld [vmem:[%s2 + $0x18] sm:$0xff]
    %v901 = vsel %vm271, %v643, 0
    %v904 = vsel %vm271, %v648, 0
    %906 = vmatprep.subr.mxu0 0.0
    %907 = vmatpush1.msra.mxu0 %v899
    %908 = vmatprep.subr.mxu0 0.0
    %909 = vmatpush1.msra.mxu0 0.0
    %910 = vmatprep.subr.mxu0 0.0
    %911 = vmatpush1.msra.mxu0 0.0
    %912 = vmatprep.subr.mxu0 0.0
    %913 = vmatpush1.msra.mxu0 0.0
    %914 = vmatprep.subr.mxu0 0.0
    %915 = vmatpush1.msra.mxu0 0.0
    %916 = vmatprep.subr.mxu0 0.0
    %917 = vmatpush1.msra.mxu0 0.0
    %918 = vmatprep.subr.mxu0 0.0
    %919 = vmatpush1.msra.mxu0 0.0
    %920 = vmatprep.subr.mxu0 0.0
    %921 = vmatpush1.msra.mxu0 0.0
    %922 = vmatprep.subr.mxu0 0.0
    %923 = vmatpush1.msra.mxu0 0.0
    %924 = vmatprep.subr.mxu0 0.0
    %925 = vmatpush1.msra.mxu0 0.0
    %926 = vmatprep.subr.mxu0 0.0
    %927 = vmatpush1.msra.mxu0 0.0
    %928 = vmatprep.subr.mxu0 0.0
    %929 = vmatpush1.msra.mxu0 0.0
    %930 = vmatprep.subr.mxu0 0.0
    %931 = vmatpush1.msra.mxu0 0.0
    %932 = vmatprep.subr.mxu0 0.0
    %933 = vmatpush1.msra.mxu0 0.0
    %934 = vmatprep.subr.mxu0 0.0
    %935 = vmatpush1.msra.mxu0 0.0
    %936 = vmatprep.subr.mxu0 0.0
    %937 = vmatpush1.msra.mxu0 0.0
    %938 = vmatprep.subr.mxu0 0.0
    %939 = vmatpush1.msra.mxu0 0.0
    %940 = vmatprep.subr.mxu0 0.0
    %941 = vmatpush1.msra.mxu0 0.0
    %942 = vmatprep.subr.mxu0 0.0
    %943 = vmatpush1.msra.mxu0 0.0
    %944 = vmatprep.subr.mxu0 0.0
    %945 = vmatpush1.msra.mxu0 0.0
    %946 = vmatprep.subr.mxu0 0.0
    %947 = vmatpush1.msra.mxu0 0.0
    %948 = vmatprep.subr.mxu0 0.0
    %949 = vmatpush1.msra.mxu0 0.0
    %950 = vmatprep.subr.mxu0 0.0
    %951 = vmatpush1.msra.mxu0 0.0
    %952 = vmatprep.subr.mxu0 0.0
    %953 = vmatpush1.msra.mxu0 0.0
    %954 = vmatprep.subr.mxu0 0.0
    %955 = vmatpush1.msra.mxu0 0.0
    %956 = vmatprep.subr.mxu0 0.0
    %957 = vmatpush1.msra.mxu0 0.0
    %958 = vmatprep.subr.mxu0 0.0
    %959 = vmatpush1.msra.mxu0 0.0
    %960 = vmatprep.subr.mxu0 0.0
    %961 = vmatpush1.msra.mxu0 0.0
    %962 = vmatprep.subr.mxu0 0.0
    %963 = vmatpush1.msra.mxu0 0.0
    %964 = vmatprep.subr.mxu0 0.0
    %965 = vmatpush1.msra.mxu0 0.0
    %966 = vmatprep.subr.mxu0 0.0
    %967 = vmatpush1.msra.mxu0 0.0
    %968 = vmatprep.subr.mxu0 0.0
    %969 = vmatpush1.msra.mxu0 0.0
    %970 = vmatprep.mubr.f32.mxu0 0.0
    %971 = vmatmul.mubr.f32.gmra.mrb[0].mxu0 %v901
    %v972 = vpop.f32.mrb[0].mxu0
    %v973 = vadd.f32 0.0, %v972
    %v974 = vpop.f32.mrb[0].mxu0
    %975 = vmatprep.mubr.f32.mxu0 0.0
    %976 = vmatmul.mubr.f32.gmra.mrb[0].mxu0 %v904
    %v977 = vpop.f32.mrb[0].mxu0
    %v978 = vadd.f32 0.0, %v977
    %v979 = vpop.f32.mrb[0].mxu0
    %980 = vdwg.mxu0
    %v981 = vadd.f32 %v897, %v973
    %v982 = vadd.f32 %v898, %v978
    %v983 = vadd.f32 %v981, %v32
    %v984 = vadd.f32 %v982, %v32
    %v985 = vmul.f32 %v983, %v983
    %v986 = vmul.f32 %v984, %v984
    %v987 = vsel %vm50, %v985, 0.0
    %988 = vadd.xlane.f32.xlu0 %v987
    %v989 = vpop.xlane.xlu0 %988
    %v990 = vsel %vm50, %v986, 0.0
    %991 = vadd.xlane.f32.xlu0 %v990
    %v992 = vpop.xlane.xlu0 %991
    %v993 = vmul.f32 %v989, 0.03125
    %v994 = vmul.f32 %v992, 0.03125
    %v995 = vadd.f32 %v993, 1e-06
    %v996 = vadd.f32 %v994, 1e-06
    %v997 = vrsqrt.pop %v995
    %v998 = vrsqrt.pop %v996
    %v999 = vmul.f32 %v983, %v997
    %v1000 = vmul.f32 %v984, %v998
    %v1001 = vmul.f32 %v999, %v35
    %v1002 = vmul.f32 %v1000, %v35
    %v1003 = vld [vmem:[%s3] sm:$0xff]
    %v1004 = vld [vmem:[%s3 + $0x8] sm:$0xff]
    %v1005 = vld [vmem:[%s3 + $0x10] sm:$0xff]
    %v1006 = vld [vmem:[%s3 + $0x18] sm:$0xff]
    %v1008 = vsel %vm50, %v1001, 0
    %v1011 = vsel %vm50, %v1002, 0
    %1013 = vmatprep.subr.mxu0 0.0
    %1014 = vmatpush1.msra.mxu0 %v1003
    %1015 = vmatprep.subr.mxu0 0.0
    %1016 = vmatpush1.msra.mxu0 %v1004
    %1017 = vmatprep.subr.mxu0 0.0
    %1018 = vmatpush1.msra.mxu0 %v1005
    %1019 = vmatprep.subr.mxu0 0.0
    %1020 = vmatpush1.msra.mxu0 %v1006
    %1021 = vmatprep.subr.mxu0 0.0
    %1022 = vmatpush1.msra.mxu0 0.0
    %1023 = vmatprep.subr.mxu0 0.0
    %1024 = vmatpush1.msra.mxu0 0.0
    %1025 = vmatprep.subr.mxu0 0.0
    %1026 = vmatpush1.msra.mxu0 0.0
    %1027 = vmatprep.subr.mxu0 0.0
    %1028 = vmatpush1.msra.mxu0 0.0
    %1029 = vmatprep.subr.mxu0 0.0
    %1030 = vmatpush1.msra.mxu0 0.0
    %1031 = vmatprep.subr.mxu0 0.0
    %1032 = vmatpush1.msra.mxu0 0.0
    %1033 = vmatprep.subr.mxu0 0.0
    %1034 = vmatpush1.msra.mxu0 0.0
    %1035 = vmatprep.subr.mxu0 0.0
    %1036 = vmatpush1.msra.mxu0 0.0
    %1037 = vmatprep.subr.mxu0 0.0
    %1038 = vmatpush1.msra.mxu0 0.0
    %1039 = vmatprep.subr.mxu0 0.0
    %1040 = vmatpush1.msra.mxu0 0.0
    %1041 = vmatprep.subr.mxu0 0.0
    %1042 = vmatpush1.msra.mxu0 0.0
    %1043 = vmatprep.subr.mxu0 0.0
    %1044 = vmatpush1.msra.mxu0 0.0
    %1045 = vmatprep.subr.mxu0 0.0
    %1046 = vmatpush1.msra.mxu0 0.0
    %1047 = vmatprep.subr.mxu0 0.0
    %1048 = vmatpush1.msra.mxu0 0.0
    %1049 = vmatprep.subr.mxu0 0.0
    %1050 = vmatpush1.msra.mxu0 0.0
    %1051 = vmatprep.subr.mxu0 0.0
    %1052 = vmatpush1.msra.mxu0 0.0
    %1053 = vmatprep.subr.mxu0 0.0
    %1054 = vmatpush1.msra.mxu0 0.0
    %1055 = vmatprep.subr.mxu0 0.0
    %1056 = vmatpush1.msra.mxu0 0.0
    %1057 = vmatprep.subr.mxu0 0.0
    %1058 = vmatpush1.msra.mxu0 0.0
    %1059 = vmatprep.subr.mxu0 0.0
    %1060 = vmatpush1.msra.mxu0 0.0
    %1061 = vmatprep.subr.mxu0 0.0
    %1062 = vmatpush1.msra.mxu0 0.0
    %1063 = vmatprep.subr.mxu0 0.0
    %1064 = vmatpush1.msra.mxu0 0.0
    %1065 = vmatprep.subr.mxu0 0.0
    %1066 = vmatpush1.msra.mxu0 0.0
    %1067 = vmatprep.subr.mxu0 0.0
    %1068 = vmatpush1.msra.mxu0 0.0
    %1069 = vmatprep.subr.mxu0 0.0
    %1070 = vmatpush1.msra.mxu0 0.0
    %1071 = vmatprep.subr.mxu0 0.0
    %1072 = vmatpush1.msra.mxu0 0.0
    %1073 = vmatprep.subr.mxu0 0.0
    %1074 = vmatpush1.msra.mxu0 0.0
    %1075 = vmatprep.subr.mxu0 0.0
    %1076 = vmatpush1.msra.mxu0 0.0
    %1077 = vmatprep.mubr.f32.mxu0 0.0
    %1078 = vmatmul.mubr.f32.gmra.mrb[0].mxu0 %v1008
    %v1079 = vpop.f32.mrb[0].mxu0
    %v1080 = vadd.f32 %v33, %v1079
    %v1081 = vpop.f32.mrb[0].mxu0
    %1082 = vmatprep.mubr.f32.mxu0 0.0
    %1083 = vmatmul.mubr.f32.gmra.mrb[0].mxu0 %v1011
    %v1084 = vpop.f32.mrb[0].mxu0
    %v1085 = vadd.f32 %v33, %v1084
    %v1086 = vpop.f32.mrb[0].mxu0
    %1087 = vdwg.mxu0
    %v1088 = vmul.f32 %v1080, 0.5
    %v1089 = vmul.f32 %v1085, 0.5
    %v1090 = vmul.f32 %v1080, %v1080
    %v1091 = vmul.f32 %v1085, %v1085
    %v1092 = vmul.f32 %v1090, %v1080
    %v1093 = vmul.f32 %v1091, %v1085
    %v1094 = vmul.f32 %v1092, 0.044715
    %v1095 = vmul.f32 %v1093, 0.044715
    %v1096 = vadd.f32 %v1080, %v1094
    %v1097 = vadd.f32 %v1085, %v1095
    %v1098 = vmul.f32 %v1096, 0.7978846
    %v1099 = vmul.f32 %v1097, 0.7978846
    %v1100 = vtanh.pop %v1098
    %v1101 = vtanh.pop %v1099
    %v1102 = vadd.f32 %v1100, 1.0
    %v1103 = vadd.f32 %v1101, 1.0
    %v1104 = vmul.f32 %v1088, %v1102
    %v1105 = vmul.f32 %v1089, %v1103
    %v1106 = vld [vmem:[%s4] sm:$0xff]
    %v1107 = vld [vmem:[%s4 + $0x8] sm:$0xff]
    %v1108 = vld [vmem:[%s4 + $0x10] sm:$0xff]
    %v1109 = vld [vmem:[%s4 + $0x18] sm:$0xff]
    %v1110 = vld [vmem:[%s4 + $0x20] sm:$0xff]
    %v1111 = vld [vmem:[%s4 + $0x28] sm:$0xff]
    %v1112 = vld [vmem:[%s4 + $0x30] sm:$0xff]
    %v1113 = vld [vmem:[%s4 + $0x38] sm:$0xff]
    %v1114 = vld [vmem:[%s4 + $0x40] sm:$0xff]
    %v1115 = vld [vmem:[%s4 + $0x48] sm:$0xff]
    %v1116 = vld [vmem:[%s4 + $0x50] sm:$0xff]
    %v1117 = vld [vmem:[%s4 + $0x58] sm:$0xff]
    %v1118 = vld [vmem:[%s4 + $0x60] sm:$0xff]
    %v1119 = vld [vmem:[%s4 + $0x68] sm:$0xff]
    %v1120 = vld [vmem:[%s4 + $0x70] sm:$0xff]
    %v1121 = vld [vmem:[%s4 + $0x78] sm:$0xff]
    %1122 = vmatprep.subr.mxu0 0.0
    %1123 = vmatpush1.msra.mxu0 %v1106
    %1124 = vmatprep.subr.mxu0 0.0
    %1125 = vmatpush1.msra.mxu0 %v1107
    %1126 = vmatprep.subr.mxu0 0.0
    %1127 = vmatpush1.msra.mxu0 %v1108
    %1128 = vmatprep.subr.mxu0 0.0
    %1129 = vmatpush1.msra.mxu0 %v1109
    %1130 = vmatprep.subr.mxu0 0.0
    %1131 = vmatpush1.msra.mxu0 %v1110
    %1132 = vmatprep.subr.mxu0 0.0
    %1133 = vmatpush1.msra.mxu0 %v1111
    %1134 = vmatprep.subr.mxu0 0.0
    %1135 = vmatpush1.msra.mxu0 %v1112
    %1136 = vmatprep.subr.mxu0 0.0
    %1137 = vmatpush1.msra.mxu0 %v1113
    %1138 = vmatprep.subr.mxu0 0.0
    %1139 = vmatpush1.msra.mxu0 %v1114
    %1140 = vmatprep.subr.mxu0 0.0
    %1141 = vmatpush1.msra.mxu0 %v1115
    %1142 = vmatprep.subr.mxu0 0.0
    %1143 = vmatpush1.msra.mxu0 %v1116
    %1144 = vmatprep.subr.mxu0 0.0
    %1145 = vmatpush1.msra.mxu0 %v1117
    %1146 = vmatprep.subr.mxu0 0.0
    %1147 = vmatpush1.msra.mxu0 %v1118
    %1148 = vmatprep.subr.mxu0 0.0
    %1149 = vmatpush1.msra.mxu0 %v1119
    %1150 = vmatprep.subr.mxu0 0.0
    %1151 = vmatpush1.msra.mxu0 %v1120
    %1152 = vmatprep.subr.mxu0 0.0
    %1153 = vmatpush1.msra.mxu0 %v1121
    %1154 = vmatprep.subr.mxu0 0.0
    %1155 = vmatpush1.msra.mxu0 0.0
    %1156 = vmatprep.subr.mxu0 0.0
    %1157 = vmatpush1.msra.mxu0 0.0
    %1158 = vmatprep.subr.mxu0 0.0
    %1159 = vmatpush1.msra.mxu0 0.0
    %1160 = vmatprep.subr.mxu0 0.0
    %1161 = vmatpush1.msra.mxu0 0.0
    %1162 = vmatprep.subr.mxu0 0.0
    %1163 = vmatpush1.msra.mxu0 0.0
    %1164 = vmatprep.subr.mxu0 0.0
    %1165 = vmatpush1.msra.mxu0 0.0
    %1166 = vmatprep.subr.mxu0 0.0
    %1167 = vmatpush1.msra.mxu0 0.0
    %1168 = vmatprep.subr.mxu0 0.0
    %1169 = vmatpush1.msra.mxu0 0.0
    %1170 = vmatprep.subr.mxu0 0.0
    %1171 = vmatpush1.msra.mxu0 0.0
    %1172 = vmatprep.subr.mxu0 0.0
    %1173 = vmatpush1.msra.mxu0 0.0
    %1174 = vmatprep.subr.mxu0 0.0
    %1175 = vmatpush1.msra.mxu0 0.0
    %1176 = vmatprep.subr.mxu0 0.0
    %1177 = vmatpush1.msra.mxu0 0.0
    %1178 = vmatprep.subr.mxu0 0.0
    %1179 = vmatpush1.msra.mxu0 0.0
    %1180 = vmatprep.subr.mxu0 0.0
    %1181 = vmatpush1.msra.mxu0 0.0
    %1182 = vmatprep.subr.mxu0 0.0
    %1183 = vmatpush1.msra.mxu0 0.0
    %1184 = vmatprep.subr.mxu0 0.0
    %1185 = vmatpush1.msra.mxu0 0.0
    %1186 = vmatprep.mubr.f32.mxu0 0.0
    %1187 = vmatmul.mubr.f32.gmra.mrb[0].mxu0 %v1104
    %v1188 = vpop.f32.mrb[0].mxu0
    %v1189 = vadd.f32 %v34, %v1188
    %v1190 = vpop.f32.mrb[0].mxu0
    %1191 = vmatprep.mubr.f32.mxu0 0.0
    %1192 = vmatmul.mubr.f32.gmra.mrb[0].mxu0 %v1105
    %v1193 = vpop.f32.mrb[0].mxu0
    %v1194 = vadd.f32 %v34, %v1193
    %v1195 = vpop.f32.mrb[0].mxu0
    %1196 = vdwg.mxu0
    %v1197 = vadd.f32 %v27, %v1189
    %v1198 = vadd.f32 %v28, %v1194
    %1199 = vst.msk [vmem:[#allocation2] sm:$0xff] %vm50, %v1197
    %1200 = vst.msk [vmem:[#allocation2 + $0x8] sm:$0xff] %vm50, %v1198
    // Predicated region
    $region30: #{tpu_custom_call.1} parent=1 // pred_check
      _
    $region31: #{tpu_custom_call.1} parent=1 // pred_check_branch
      %1202 = sbr.rel (0) target = $region33
    $region32: #{tpu_custom_call.1} parent=1 // pred_region
      %s1204 = ssub.s32 256, 256
      %1205 = vsyncadd [#allocation3], %s1204
      %s1206 = sshll.u32 [#allocation2], 4
      %s1207 = int_to_ptr.vmem [resolvable:$true] %s1206
      %1212 = dma.vmem_to_hbm [thread:$0]  %s1207, 256, %s7, [#allocation3], 128, 128, 8
    $region33: #{tpu_custom_call.1} parent=1 // pred_fallthru
      _
    // Predicated region
    $region34: #{tpu_custom_call.1} parent=1 // pred_check
      _
    $region35: #{tpu_custom_call.1} parent=1 // pred_check_branch
      %1214 = sbr.rel (0) target = $region37
    $region36: #{tpu_custom_call.1} parent=1 // pred_region
      %1215 = dma.done [#allocation3], 256
    $region37: #{tpu_custom_call.1} parent=1 // pred_fallthru
      _
    %1216 = vsyncpa [#allocation3], 1

</llo_original>
